<compile_context>
chip_gen: v6e
topology: v6e:2x2x1
jax: 0.10.0
libtpu: 0.0.40
codegen_flags: <defaults>
</compile_context>

<pallas_src>
import jax
import jax.numpy as jnp
from jax import lax
from jax.experimental import pallas as pl
from jax.experimental.pallas import tpu as pltpu


# --------------------------------------------------------------------------
# Batched, lane-dense path (primary): B instances, B on the 128-lane axis.
# --------------------------------------------------------------------------
def _comp_sum_lane_dense_kernel(x_ref, w_ref, b_ref, o_ref):
    # x_ref: (N, D_in, TB). Sum over the stacked-list axis N -> (D_in, TB).
    # N is an outer (non-tiled) axis, so this is N cheap VPU vreg adds.
    combined_t = jnp.sum(x_ref[...], axis=0)                       # (D_in, TB)
    # out^T = W @ combined^T.  W is (D_out, D_in); contract its dim 1 against
    # combined_t dim 0 => MXU-native (K, N) RHS, batch on lanes, no transpose.
    y = lax.dot_general(
        w_ref[...], combined_t,
        dimension_numbers=(((1,), (0,)), ((), ())),
        preferred_element_type=jnp.float32)                        # (D_out, TB)
    # b_ref is (D_out, 1): broadcast across the lane (batch) axis.
    o_ref[...] = jnp.tanh(y + b_ref[...])


def _vmem_limit_bytes(n, d, tb):
    # Double-buffered x and out blocks + resident W/bias, with 4x headroom,
    # floored at 8 MiB and capped at 32 MiB (safe on v5e/v6e/v7x).
    block_bytes = 2 * (n * d * tb + d * tb) * 4 + (d * d + d) * 4
    return int(min(max(4 * block_bytes, 8 << 20), 32 << 20))


def compositional_summation_nn_batched(x_batched, weight, bias, *, tb=128):
    """B independent subtree compositions in one launch.

    x_batched: (B, N, D) f32, weight: (D, D) f32, bias: (D,) f32 -> (B, D) f32
    where out[b] == tanh(sum_n x_batched[b, n] @ W.T + b).
    """
    b, n, d = x_batched.shape
    if tb % 128 != 0:
        raise ValueError("tb must be a multiple of 128 for lane density")
    padded_b = ((b + tb - 1) // tb) * tb
    tb = min(tb, padded_b)

    # Layout plumbing (cheap XLA ops outside the kernel): put B on lanes.
    x_t = jnp.transpose(x_batched, (1, 2, 0))                      # (N, D, B)
    if padded_b != b:
        x_t = jnp.pad(x_t, ((0, 0), (0, 0), (0, padded_b - b)))
    bias_col = bias.reshape(d, 1)                                  # (D, 1)

    grid = (padded_b // tb,)
    out_t = pl.pallas_call(
        _comp_sum_lane_dense_kernel,
        out_shape=jax.ShapeDtypeStruct((d, padded_b), jnp.float32),
        grid=grid,
        in_specs=[
            pl.BlockSpec((n, d, tb), lambda i: (0, 0, i)),         # x^T tile
            pl.BlockSpec((d, d), lambda i: (0, 0)),                # W (resident)
            pl.BlockSpec((d, 1), lambda i: (0, 0)),                # bias (resident)
        ],
        out_specs=pl.BlockSpec((d, tb), lambda i: (0, i)),         # out^T tile
        compiler_params=pltpu.CompilerParams(
            dimension_semantics=("parallel",),
            vmem_limit_bytes=_vmem_limit_bytes(n, d, tb)),
    )(x_t, weight, bias_col)

    return jnp.transpose(out_t, (1, 0))[:b]                        # (B, D)


# --------------------------------------------------------------------------
# Single-instance fallback (exact module semantics, gridless).
# --------------------------------------------------------------------------
def _comp_sum_kernel(x_ref, w_ref, b_ref, o_ref):
    combined = jnp.sum(x_ref[...], axis=0, keepdims=True)          # (1, D)
    # combined @ W.T via contraction of both dim-1 axes (x @ W.T, no bias yet).
    y = lax.dot_general(
        combined, w_ref[...],
        dimension_numbers=(((1,), (1,)), ((), ())),
        preferred_element_type=jnp.float32)                        # (1, D)
    o_ref[...] = jnp.tanh(y + b_ref[...])


def compositional_summation_nn(x_stacked, weight, bias):
    """Single instance (matches the PyTorch module exactly).

    x_stacked: (N, D) f32, weight: (D, D) f32, bias: (D,) f32 -> (1, D) f32.
    Latency is ~100% launch overhead at these shapes; prefer the batched path.
    """
    n, d = x_stacked.shape
    vmem = pl.BlockSpec(memory_space=pltpu.MemorySpace.VMEM)
    return pl.pallas_call(
        _comp_sum_kernel,
        out_shape=jax.ShapeDtypeStruct((1, d), jnp.float32),
        in_specs=[vmem, vmem, vmem],
        out_specs=vmem,
    )(x_stacked, weight, bias.reshape(1, d))


# --------------------------------------------------------------------------
# Pure-JAX reference.
# --------------------------------------------------------------------------
def reference_single(x_stacked, weight, bias):
    combined = jnp.sum(x_stacked, axis=0, keepdims=True)
    return jnp.tanh(combined @ weight.T + bias[None, :])


def reference_batched(x_batched, weight, bias):
    combined = jnp.sum(x_batched, axis=1)
    return jnp.tanh(combined @ weight.T + bias[None, :])


if __name__ == "__main__":
    lstm_dim = 32   # hidden size D
    seq = 8         # number of (1, D) tensors in the input list `x`

    key = jax.random.PRNGKey(0)
    kx, kw, kb, kxb, kxr = jax.random.split(key, 5)

    # The PyTorch forward takes a list of (1, D) tensors; emulate that and
    # stack them (the torch.cat) into an (N, D) array for the kernel.
    x_list = [jax.random.normal(jax.random.fold_in(kx, i), (1, lstm_dim),
                                dtype=jnp.float32) for i in range(seq)]
    x_stacked = jnp.concatenate(x_list, axis=0)                    # (N, D)

    # Deterministic nn.Linear(lstm_dim, lstm_dim) params (PyTorch-style uniform).
    bound = 1.0 / (lstm_dim ** 0.5)
    weight = jax.random.uniform(kw, (lstm_dim, lstm_dim),
                                minval=-bound, maxval=bound, dtype=jnp.float32)
    bias = jax.random.uniform(kb, (lstm_dim,),
                              minval=-bound, maxval=bound, dtype=jnp.float32)

    # --- single-instance fallback path (module semantics) ---
    out = jax.block_until_ready(
        compositional_summation_nn(x_stacked, weight, bias))
    ref = reference_single(x_stacked, weight, bias)
    assert out.shape == (1, lstm_dim)
    assert jnp.allclose(out, ref, atol=1e-5, rtol=1e-5)

    # --- batched lane-dense path: B on the 128-lane axis, grid over B ---
    batch = 256   # 2 lane tiles of 128 -> grid=(2,), both tiles lane-dense
    x_batched = jax.random.normal(kxb, (batch, seq, lstm_dim), dtype=jnp.float32)
    out_b = jax.block_until_ready(
        compositional_summation_nn_batched(x_batched, weight, bias))
    ref_b = reference_batched(x_batched, weight, bias)
    assert out_b.shape == (batch, lstm_dim)
    assert jnp.allclose(out_b, ref_b, atol=1e-5, rtol=1e-5)

    # --- ragged batch (exercises the pad-to-lane-tile / slice path) ---
    batch_r = 100
    x_ragged = jax.random.normal(kxr, (batch_r, seq, lstm_dim), dtype=jnp.float32)
    out_r = jax.block_until_ready(
        compositional_summation_nn_batched(x_ragged, weight, bias))
    ref_r = reference_batched(x_ragged, weight, bias)
    assert out_r.shape == (batch_r, lstm_dim)
    assert jnp.allclose(out_r, ref_r, atol=1e-5, rtol=1e-5)

    print("KERNEL_OK")
</pallas_src>

<mosaic_0001>
module attributes {stable_mosaic.version = 11 : i64} {
  func.func @_comp_sum_kernel(%arg0: memref<8x32xf32, #tpu.memory_space<vmem>>, %arg1: memref<32x32xf32, #tpu.memory_space<vmem>>, %arg2: memref<1x32xf32, #tpu.memory_space<vmem>>, %arg3: memref<1x32xf32, #tpu.memory_space<vmem>>) attributes {dimension_semantics = [], scalar_prefetch = 0 : i64, scratch_operands = 0 : i64, tpu.core_type = #tpu.core_type<tc>} {
    %c0 = arith.constant 0 : index
    %c0_0 = arith.constant 0 : index
    %0 = vector.load %arg0[%c0, %c0_0] : memref<8x32xf32, #tpu.memory_space<vmem>>, vector<8x32xf32>
    %cst = arith.constant dense<0.000000e+00> : vector<32xf32>
    %1 = vector.multi_reduction <add>, %0, %cst [0] : vector<8x32xf32> to vector<32xf32>
    %2 = vector.shape_cast %1 : vector<32xf32> to vector<1x32xf32>
    %c0_1 = arith.constant 0 : index
    %c0_2 = arith.constant 0 : index
    %3 = vector.load %arg1[%c0_1, %c0_2] : memref<32x32xf32, #tpu.memory_space<vmem>>, vector<32x32xf32>
    %cst_3 = arith.constant dense<0.000000e+00> : vector<1x32xf32>
    %4 = tpu.matmul %2, %3, %cst_3 {dimension_numbers = #tpu.dot_dimension_numbers<[1], [1], [0], [0], [0, 0, 1, 0], [], []>} : vector<1x32xf32>, vector<32x32xf32>, vector<1x32xf32> -> vector<1x32xf32>
    %c0_4 = arith.constant 0 : index
    %c0_5 = arith.constant 0 : index
    %5 = vector.load %arg2[%c0_4, %c0_5] : memref<1x32xf32, #tpu.memory_space<vmem>>, vector<1x32xf32>
    %6 = arith.addf %4, %5 : vector<1x32xf32>
    %7 = math.tanh %6 : vector<1x32xf32>
    %c0_6 = arith.constant 0 : index
    %c0_7 = arith.constant 0 : index
    %8 = vector.load %arg3[%c0_6, %c0_7] : memref<1x32xf32, #tpu.memory_space<vmem>>, vector<1x32xf32>
    tpu.vector_store %arg3[%c0_6, %c0_7], %7 {strides = array<i32>} : memref<1x32xf32, #tpu.memory_space<vmem>>, vector<1x32xf32>,
    return
  }
}

</mosaic_0001>

<llo_original>
// kernel: tpu_custom_call.1
$region0: #{tpu_custom_call.1}
  #allocation0 [shape = 'u32[]', space=smem, size = 0x4, offset = 0x4, fixed_abs, tag = 'smem constant byte address 0x4 - core index']
  #allocation1 [shape = 'u32[144,128]{1,0:T(1,128)}', space=vmem, size = 0x12000, scoped, tag = 'internal scratch']
  %s0 = inlined_call_operand.hbm [shape: f32[8,32], index: 0, kind: input, shape index: {}]
  %s1 = inlined_call_operand.hbm [shape: f32[32,32], index: 1, kind: input, shape index: {}]
  %s2 = inlined_call_operand.vmem [shape: f32[1,32], index: 2, kind: input, shape index: {}]
  %s3 = inlined_call_operand.hbm [shape: f32[1,32], index: 3, kind: output, shape index: {}]
  %s4 = sld [smem:[#allocation0]]
  $region30: #{tpu_custom_call.1} parent=0
    _
  %s6 = ssub.s32 1, %s4
  %s7 = scalar_select 0, %s6, %s4
  $region1: #{tpu_custom_call.1} parent=0
    #allocation2 [shape = 'u8[4096]{0}', space=vmem, size = 0x1000, scoped, tag = 'input window, operand 0, single buffered']
    #allocation3 [shape = 's32[1]{0}', space=sflag, size = 0x4, scoped, tag = 'scoped memory for tpu_custom_call.1']
    #allocation4 [shape = 's32[1]{0}', space=sflag, size = 0x4, scoped, tag = 'scoped memory for tpu_custom_call.1']
    #allocation5 [shape = 'u8[16384]{0}', space=vmem, size = 0x4000, scoped, tag = 'input window, operand 1, single buffered']
    #allocation6 [shape = 's32[1]{0}', space=sflag, size = 0x4, scoped, tag = 'scoped memory for tpu_custom_call.1']
    #allocation7 [shape = 'u8[512]{0}', space=vmem, size = 0x400, scoped, tag = 'output window, operand 0, single buffered']
    %8 = vsyncpa [#allocation3], 0
    %9 = vsyncpa [#allocation6], 0
    %10 = vsyncpa [#allocation4], 0
    // Predicated region
    $region2: #{tpu_custom_call.1} parent=1 // pred_check
      _
    $region3: #{tpu_custom_call.1} parent=1 // pred_check_branch
      %12 = sbr.rel (0) target = $region5
    $region4: #{tpu_custom_call.1} parent=1 // pred_region
      %s14 = ssub.s32 128, 128
      %15 = vsyncadd [#allocation3], %s14
      %s17 = sshll.u32 [#allocation2], 4
      %s18 = int_to_ptr.vmem [resolvable:$true] %s17
      %20 = dma.hbm_to_vmem [thread:$0]  %s0, 128, %s18, [#allocation3]
    $region5: #{tpu_custom_call.1} parent=1 // pred_fallthru
      _
    // Predicated region
    $region6: #{tpu_custom_call.1} parent=1 // pred_check
      _
    $region7: #{tpu_custom_call.1} parent=1 // pred_check_branch
      %22 = sbr.rel (0) target = $region9
    $region8: #{tpu_custom_call.1} parent=1 // pred_region
      %s24 = ssub.s32 512, 512
      %25 = vsyncadd [#allocation6], %s24
      %s26 = sshll.u32 [#allocation5], 4
      %s27 = int_to_ptr.vmem [resolvable:$true] %s26
      %32 = dma.hbm_to_vmem [thread:$0]  %s1, 512, %s27, [#allocation6], 128, 128, 8
    $region9: #{tpu_custom_call.1} parent=1 // pred_fallthru
      _
    // Predicated region
    $region10: #{tpu_custom_call.1} parent=1 // pred_check
      _
    $region11: #{tpu_custom_call.1} parent=1 // pred_check_branch
      %34 = sbr.rel (0) target = $region13
    $region12: #{tpu_custom_call.1} parent=1 // pred_region
      _
    $region13: #{tpu_custom_call.1} parent=1 // pred_fallthru
      _
    // Predicated region
    $region14: #{tpu_custom_call.1} parent=1 // pred_check
      _
    $region15: #{tpu_custom_call.1} parent=1 // pred_check_branch
      %36 = sbr.rel (0) target = $region17
    $region16: #{tpu_custom_call.1} parent=1 // pred_region
      %37 = dma.done [#allocation3], 128
    $region17: #{tpu_custom_call.1} parent=1 // pred_fallthru
      _
    // Predicated region
    $region18: #{tpu_custom_call.1} parent=1 // pred_check
      _
    $region19: #{tpu_custom_call.1} parent=1 // pred_check_branch
      %39 = sbr.rel (0) target = $region21
    $region20: #{tpu_custom_call.1} parent=1 // pred_region
      %40 = dma.done [#allocation6], 512
    $region21: #{tpu_custom_call.1} parent=1 // pred_fallthru
      _
    %v41 = vld [vmem:[#allocation2] sm:$0xff]
    %vm42 = vcmask 261120
    %v43 = vsel %vm42, %v41, 0.0
    %v44 = vrot.slane %v43, 4
    %v45 = vadd.f32 %v43, %v44
    %v46 = vrot.slane %v45, 2
    %v47 = vadd.f32 %v45, %v46
    %v48 = vrot.slane %v47, 1
    %v49 = vadd.f32 %v47, %v48
    %v50 = vld [vmem:[#allocation5] sm:$0xff]
    %v51 = vld [vmem:[#allocation5 + $0x8] sm:$0xff]
    %v52 = vld [vmem:[#allocation5 + $0x10] sm:$0xff]
    %v53 = vld [vmem:[#allocation5 + $0x18] sm:$0xff]
    %v54 = vld [vmem:[%s2] sm:$0x1]
    %v56 = vsel %vm42, %v49, 0
    %v59 = vsel %vm42, %v50, 0
    %v62 = vsel %vm42, %v51, 0
    %v65 = vsel %vm42, %v52, 0
    %v68 = vsel %vm42, %v53, 0
    %70 = vmatprep.subr.mxu0 0.0
    %71 = vmatpush1.xpose.msra.mxu0 0.0
    %72 = vmatprep.subr.mxu0 0.0
    %73 = vmatpush1.xpose.msra.mxu0 0.0
    %74 = vmatprep.subr.mxu0 0.0
    %75 = vmatpush1.xpose.msra.mxu0 0.0
    %76 = vmatprep.subr.mxu0 0.0
    %77 = vmatpush1.xpose.msra.mxu0 0.0
    %78 = vmatprep.subr.mxu0 0.0
    %79 = vmatpush1.xpose.msra.mxu0 0.0
    %80 = vmatprep.subr.mxu0 0.0
    %81 = vmatpush1.xpose.msra.mxu0 0.0
    %82 = vmatprep.subr.mxu0 0.0
    %83 = vmatpush1.xpose.msra.mxu0 0.0
    %84 = vmatprep.subr.mxu0 0.0
    %85 = vmatpush1.xpose.msra.mxu0 0.0
    %86 = vmatprep.subr.mxu0 0.0
    %87 = vmatpush1.xpose.msra.mxu0 0.0
    %88 = vmatprep.subr.mxu0 0.0
    %89 = vmatpush1.xpose.msra.mxu0 0.0
    %90 = vmatprep.subr.mxu0 0.0
    %91 = vmatpush1.xpose.msra.mxu0 0.0
    %92 = vmatprep.subr.mxu0 0.0
    %93 = vmatpush1.xpose.msra.mxu0 0.0
    %94 = vmatprep.subr.mxu0 0.0
    %95 = vmatpush1.xpose.msra.mxu0 %v68
    %96 = vmatprep.subr.mxu0 0.0
    %97 = vmatpush1.xpose.msra.mxu0 %v65
    %98 = vmatprep.subr.mxu0 0.0
    %99 = vmatpush1.xpose.msra.mxu0 %v62
    %100 = vmatprep.subr.mxu0 0.0
    %101 = vmatpush1.xpose.msra.mxu0 %v59
    %102 = vmatprep.subr.mxu0 0.0
    %103 = vmatpush2.xpose.msra.mxu0 0.0
    %104 = vmatprep.subr.mxu0 0.0
    %105 = vmatpush2.xpose.msra.mxu0 0.0
    %106 = vmatprep.subr.mxu0 0.0
    %107 = vmatpush2.xpose.msra.mxu0 0.0
    %108 = vmatprep.subr.mxu0 0.0
    %109 = vmatpush2.xpose.msra.mxu0 0.0
    %110 = vmatprep.subr.mxu0 0.0
    %111 = vmatpush2.xpose.msra.mxu0 0.0
    %112 = vmatprep.subr.mxu0 0.0
    %113 = vmatpush2.xpose.msra.mxu0 0.0
    %114 = vmatprep.subr.mxu0 0.0
    %115 = vmatpush2.xpose.msra.mxu0 0.0
    %116 = vmatprep.subr.mxu0 0.0
    %117 = vmatpush2.xpose.msra.mxu0 0.0
    %118 = vmatprep.subr.mxu0 0.0
    %119 = vmatpush2.xpose.msra.mxu0 0.0
    %120 = vmatprep.subr.mxu0 0.0
    %121 = vmatpush2.xpose.msra.mxu0 0.0
    %122 = vmatprep.subr.mxu0 0.0
    %123 = vmatpush2.xpose.msra.mxu0 0.0
    %124 = vmatprep.subr.mxu0 0.0
    %125 = vmatpush2.xpose.msra.mxu0 0.0
    %126 = vmatprep.subr.mxu0 0.0
    %127 = vmatpush2.xpose.msra.mxu0 0.0
    %128 = vmatprep.subr.mxu0 0.0
    %129 = vmatpush2.xpose.msra.mxu0 0.0
    %130 = vmatprep.subr.mxu0 0.0
    %131 = vmatpush2.xpose.msra.mxu0 0.0
    %132 = vmatprep.subr.mxu0 0.0
    %133 = vmatpush2.xpose.msra.mxu0 0.0
    %134 = vmatprep.mubr.f32.mxu0 0.0
    %135 = vmatmul.mubr.f32.gmra.mxu0 %v56
    %v136 = vpop.f32.mrf.mxu0
    %v137 = vadd.f32 %v54, %v136
    %v138 = vpop.f32.mrf.mxu0
    %139 = vdwg.mxu0
    %v140 = vtanh.pop %v137
    %vm141 = vcmask 253952
    %142 = vst.msk [vmem:[#allocation7] sm:$0x1] %vm141, %v140
    // Predicated region
    $region22: #{tpu_custom_call.1} parent=1 // pred_check
      _
    $region23: #{tpu_custom_call.1} parent=1 // pred_check_branch
      %144 = sbr.rel (0) target = $region25
    $region24: #{tpu_custom_call.1} parent=1 // pred_region
      %s146 = ssub.s32 16, 16
      %147 = vsyncadd [#allocation4], %s146
      %s149 = sshll.u32 [#allocation7], 4
      %s150 = int_to_ptr.vmem [resolvable:$true] %s149
      %152 = dma.vmem_to_hbm [thread:$0]  %s150, 16, %s3, [#allocation4]
    $region25: #{tpu_custom_call.1} parent=1 // pred_fallthru
      _
    // Predicated region
    $region26: #{tpu_custom_call.1} parent=1 // pred_check
      _
    $region27: #{tpu_custom_call.1} parent=1 // pred_check_branch
      %154 = sbr.rel (0) target = $region29
    $region28: #{tpu_custom_call.1} parent=1 // pred_region
      %155 = dma.done [#allocation4], 16
    $region29: #{tpu_custom_call.1} parent=1 // pred_fallthru
      _
    %156 = vsyncpa [#allocation3], 1
    %157 = vsyncpa [#allocation6], 1
    %158 = vsyncpa [#allocation4], 1

</llo_original>
